<compile_context>
chip_gen: v7x
topology: tpu7x:2x2x1
jax: 0.10.0
libtpu: 0.0.40
codegen_flags: <defaults>
</compile_context>

<pallas_src>
import functools

import jax
import jax.numpy as jnp
from jax.experimental import pallas as pl
from jax.experimental.pallas import tpu as pltpu

SCALE_VALUE = 1.0
_LANES = 128
_LANE_WIDTHS = (4096, 2048, 1024, 512, 256, 128)
_SMALL_TENSOR_BYTES = 1 << 20          # below this, skip Pallas entirely


def _scale_kernel(scale_ref, x_ref, o_ref, *, upcast):
    # scale_ref: (1,) f32 in SMEM, already transformed in the wrapper.
    s = scale_ref[0]
    if upcast:
        # v5e path for sub-32-bit dtypes (VPU has no bf16 ALU).
        o_ref[...] = (x_ref[...].astype(jnp.float32) * s).astype(o_ref.dtype)
    else:
        # Native-dtype multiply: no per-vreg pack/unpack converts.
        o_ref[...] = x_ref[...] * s.astype(o_ref.dtype)


def scale_layer_init(init_value=None, scale_mode="linear", dtype=jnp.float32):
    """Deterministic parameter init mirroring ScaleLayer.__init__ (raw param)."""
    if init_value is None:
        init_value = SCALE_VALUE
    if scale_mode == "linear":
        return jnp.array([init_value], dtype=dtype)
    if scale_mode == "softplus":
        # inv_softplus(x) = log(expm1(x))
        return jnp.log(jnp.expm1(jnp.array([init_value], dtype=dtype)))
    if scale_mode == "sigmoid":
        return jnp.log(jnp.array([init_value / (1.0 - init_value)], dtype=dtype))
    raise NotImplementedError(scale_mode)


def _transform_scale(scale_param, scale_mode):
    """ScaleLayer.get_scale(), done once in f32 outside the per-tile loop."""
    s = scale_param.astype(jnp.float32).reshape((1,))
    if scale_mode == "linear":
        return s
    if scale_mode == "softplus":
        return jax.nn.softplus(s)        # numerically stable softplus
    if scale_mode == "sigmoid":
        return jax.nn.sigmoid(s)
    raise NotImplementedError(scale_mode)


def _tpu_generation_config():
    """Returns (block_bytes_per_buffer, vmem_limit_bytes_or_None, f32_upcast_for_subword)."""
    try:
        kind = jax.devices()[0].device_kind.lower()
    except Exception:  # pragma: no cover - defensive
        kind = ""
    if "v7" in kind or "tpu7" in kind:
        # 8 MiB blocks -> 32 MiB with in+out double-buffering; raise the scoped
        # VMEM limit explicitly (64 MiB physical) so the compiler accepts it.
        return 8 << 20, 48 << 20, False
    if "v6" in kind or "tpu v6" in kind:
        # 16 MiB total double-buffered footprint fits v6e's 32 MiB scoped default.
        return 4 << 20, None, False
    # v5e and unknown/older: 8 MiB total fits the 16 MiB scoped default;
    # sub-32-bit math goes through f32 (no bf16 VPU).
    return 2 << 20, None, True


def _run_pallas_scale(scale, x_flat, orig_dtype, donate_input):
    """Kernel on a flat, 128-aligned tensor. Returns the flat scaled result."""
    n = x_flat.shape[0]
    itemsize = jnp.dtype(orig_dtype).itemsize
    block_bytes, vmem_limit, f32_upcast_subword = _tpu_generation_config()

    lane_w = next(w for w in _LANE_WIDTHS if n % w == 0)
    rows = n // lane_w

    block_rows = max(1, block_bytes // (lane_w * itemsize))
    if block_rows >= rows:
        block_rows = rows                               # full-dim block (always legal)
    else:
        # multiple of 32 keeps bf16 (16,128) / int8 (32,128) sublane tiles aligned
        block_rows = max(32, (block_rows // 32) * 32)

    x2d = x_flat.reshape(rows, lane_w)
    grid = (pl.cdiv(rows, block_rows),)                 # partial last block handled by Pallas

    upcast = f32_upcast_subword and itemsize < 4
    kernel = functools.partial(_scale_kernel, upcast=upcast)

    cp_kwargs = dict(dimension_semantics=("parallel",))
    if vmem_limit is not None:
        cp_kwargs["vmem_limit_bytes"] = vmem_limit

    out2d = pl.pallas_call(
        kernel,
        out_shape=jax.ShapeDtypeStruct((rows, lane_w), orig_dtype),
        grid_spec=pltpu.PrefetchScalarGridSpec(
            num_scalar_prefetch=0,
            grid=grid,
            in_specs=[
                pl.BlockSpec(memory_space=pltpu.SMEM),                 # (1,) f32 scale
                pl.BlockSpec((block_rows, lane_w), lambda i: (i, 0)),  # x tile
            ],
            out_specs=pl.BlockSpec((block_rows, lane_w), lambda i: (i, 0)),
        ),
        compiler_params=pltpu.CompilerParams(**cp_kwargs),
        cost_estimate=pl.CostEstimate(
            flops=n, transcendentals=0, bytes_accessed=2 * n * itemsize),
        input_output_aliases=({1: 0} if donate_input else {}),
    )(scale, x2d)
    return out2d.reshape(-1)


def scale_layer_forward(scale_param, x, scale_mode="linear", *,
                        min_pallas_bytes=_SMALL_TENSOR_BYTES, donate_input=False):
    """Apply ScaleLayer.forward. Works for any x shape / floating dtype.

    min_pallas_bytes: tensors smaller than this take a pure-jnp path (XLA fuses
                      the broadcast multiply; pallas_call overhead would dominate).
    donate_input:     if the caller donates x, alias it to the output HBM buffer.
    """
    orig_shape = x.shape
    orig_dtype = x.dtype
    n = x.size
    itemsize = jnp.dtype(orig_dtype).itemsize

    scale = _transform_scale(scale_param, scale_mode)   # (1,) f32

    # Tiny-tensor fast path.
    if n == 0 or n * itemsize < min_pallas_bytes:
        return (scale[0] * x.astype(jnp.float32)).astype(orig_dtype)

    x_flat = x.reshape(-1)
    n_main = (n // _LANES) * _LANES
    if n_main == 0:
        # Whole tensor is smaller than one lane row.
        return (scale[0] * x.astype(jnp.float32)).astype(orig_dtype)

    if n_main == n:
        out_flat = _run_pallas_scale(scale, x_flat, orig_dtype, donate_input)
    else:
        # 128-aligned prefix through the kernel; <128-element tail in plain jnp
        # (avoids the full-tensor pad + slice the old fallback paid).
        main = _run_pallas_scale(scale, x_flat[:n_main], orig_dtype, donate_input)
        tail = (scale[0] * x_flat[n_main:].astype(jnp.float32)).astype(orig_dtype)
        out_flat = jnp.concatenate([main, tail])

    return out_flat.reshape(orig_shape)


def _reference(scale_param, x, scale_mode):
    s = scale_param.astype(jnp.float32)
    if scale_mode == "linear":
        scale = s
    elif scale_mode == "softplus":
        scale = jax.nn.softplus(s)
    elif scale_mode == "sigmoid":
        scale = jax.nn.sigmoid(s)
    else:
        raise NotImplementedError(scale_mode)
    return (scale * x.astype(jnp.float32)).astype(x.dtype)


if __name__ == "__main__":
    key = jax.random.PRNGKey(0)
    # NCHW input like a conv feature map: batch=2, channels=4, spatial=16x16
    x = jax.random.normal(key, (2, 4, 16, 16), dtype=jnp.float32)
    # Odd-sized input to exercise the 128-aligned prefix + jnp-tail path.
    x_odd = jax.random.normal(jax.random.PRNGKey(1), (3, 5, 7, 9), dtype=jnp.float32)

    ok = True
    for mode, init in [("linear", None), ("softplus", 1.0), ("sigmoid", 0.5)]:
        p = scale_layer_init(init, scale_mode=mode)
        ref = _reference(p, x, mode)
        # Force the Pallas kernel path even at this small demo size.
        out = jax.block_until_ready(
            scale_layer_forward(p, x, scale_mode=mode, min_pallas_bytes=0))
        ok &= bool(jnp.allclose(out, ref, atol=1e-5, rtol=1e-5))
        # Default path (small tensor -> jnp fast path) must match too.
        out_fast = jax.block_until_ready(scale_layer_forward(p, x, scale_mode=mode))
        ok &= bool(jnp.allclose(out_fast, ref, atol=1e-5, rtol=1e-5))

    p = scale_layer_init(0.5, scale_mode="sigmoid")
    out_odd = jax.block_until_ready(
        scale_layer_forward(p, x_odd, scale_mode="sigmoid", min_pallas_bytes=0))
    ok &= bool(jnp.allclose(out_odd, _reference(p, x_odd, "sigmoid"), atol=1e-5, rtol=1e-5))

    if ok:
        print("KERNEL_OK")
    else:
        raise SystemExit("MISMATCH vs reference")
</pallas_src>

<mosaic_0001>
module attributes {stable_mosaic.version = 11 : i64} {
  func.func @_scale_kernel(%arg0: i32, %arg1: memref<1xf32, #tpu.memory_space<smem>>, %arg2: memref<1x2048xf32, #tpu.memory_space<vmem>>, %arg3: memref<1x2048xf32, #tpu.memory_space<vmem>>) attributes {dimension_semantics = [#tpu.dimension_semantics<parallel>], iteration_bounds = array<i64: 1>, scalar_prefetch = 0 : i64, scratch_operands = 0 : i64, tpu.core_type = #tpu.core_type<tc>, window_params = [{transform_indices = @transform_0, window_bounds = array<i64: 1>}, {transform_indices = @transform_1, window_bounds = array<i64: 1, 2048>}, {transform_indices = @transform_2, window_bounds = array<i64: 1, 2048>}]} {
    %c0 = arith.constant 0 : index
    %0 = memref.load %arg1[%c0] : memref<1xf32, #tpu.memory_space<smem>>
    %c0_0 = arith.constant 0 : index
    %c0_1 = arith.constant 0 : index
    %1 = vector.load %arg2[%c0_0, %c0_1] : memref<1x2048xf32, #tpu.memory_space<vmem>>, vector<1x2048xf32>
    %2 = vector.broadcast %0 : f32 to vector<1x2048xf32>
    %3 = arith.mulf %1, %2 : vector<1x2048xf32>
    %c0_2 = arith.constant 0 : index
    %c0_3 = arith.constant 0 : index
    %4 = vector.load %arg3[%c0_2, %c0_3] : memref<1x2048xf32, #tpu.memory_space<vmem>>, vector<1x2048xf32>
    tpu.vector_store %arg3[%c0_2, %c0_3], %3 {strides = array<i32>} : memref<1x2048xf32, #tpu.memory_space<vmem>>, vector<1x2048xf32>,
    return
  }
  func.func @transform_0(%arg0: i32) -> i32 {
    %c0_i32 = arith.constant 0 : i32
    %c0_i32_0 = arith.constant 0 : i32
    return %c0_i32 : i32
  }
  func.func @transform_1(%arg0: i32) -> (i32, i32) {
    %c0_i32 = arith.constant 0 : i32
    %c0_i32_0 = arith.constant 0 : i32
    return %arg0, %c0_i32 : i32, i32
  }
  func.func @transform_2(%arg0: i32) -> (i32, i32) {
    %c0_i32 = arith.constant 0 : i32
    %c0_i32_0 = arith.constant 0 : i32
    return %arg0, %c0_i32 : i32, i32
  }
}

</mosaic_0001>

<llo_original>
// kernel: tpu_custom_call.1
$region0: #{tpu_custom_call.1}
  #allocation0 [shape = 'u32[]', space=smem, size = 0x4, offset = 0x4, fixed_abs, tag = 'smem constant byte address 0x4 - core index']
  #allocation1 [shape = 'u32[144,128]{1,0:T(1,128)}', space=vmem, size = 0x12000, scoped, tag = 'internal scratch']
  #allocation2 [shape = 'f32[1]{0:T(128)S(6)}', space=smem, size = 0x200, scoped, tag = 'scoped memory for tpu_custom_call.1']
  %s0 = inlined_call_operand.<no memory space> [shape: f32[1], index: 0, kind: input, shape index: {}]
  %s1 = inlined_call_operand.hbm [shape: f32[1,2048], index: 1, kind: input, shape index: {}]
  %s2 = inlined_call_operand.hbm [shape: f32[1,2048], index: 2, kind: output, shape index: {}]
  %s3 = sld [smem:[#allocation0]]
  $region22: #{tpu_custom_call.1} parent=0
    _
  %s5 = ssub.s32 1, %s3
  %s6 = scalar_select 0, %s5, %s3
  %7 = sst [smem:[#allocation2]] %s0
  $region1: #{tpu_custom_call.1} parent=0
    #allocation3 [shape = 'u8[8192]{0}', space=vmem, size = 0x2000, scoped, tag = 'input window, operand 1, single buffered']
    #allocation4 [shape = 's32[1]{0}', space=sflag, size = 0x4, scoped, tag = 'scoped memory for tpu_custom_call.1']
    #allocation5 [shape = 's32[1]{0}', space=sflag, size = 0x4, scoped, tag = 'scoped memory for tpu_custom_call.1']
    #allocation6 [shape = 'u8[8192]{0}', space=vmem, size = 0x2000, scoped, tag = 'output window, operand 0, single buffered']
    %8 = vsyncpa [#allocation4], 0
    %9 = vsyncpa [#allocation5], 0
    // Predicated region
    $region2: #{tpu_custom_call.1} parent=1 // pred_check
      _
    $region3: #{tpu_custom_call.1} parent=1 // pred_check_branch
      %11 = sbr.rel (0) target = $region5
    $region4: #{tpu_custom_call.1} parent=1 // pred_region
      _
    $region5: #{tpu_custom_call.1} parent=1 // pred_fallthru
      _
    // Predicated region
    $region6: #{tpu_custom_call.1} parent=1 // pred_check
      _
    $region7: #{tpu_custom_call.1} parent=1 // pred_check_branch
      %13 = sbr.rel (0) target = $region9
    $region8: #{tpu_custom_call.1} parent=1 // pred_region
      %s15 = ssub.s32 256, 256
      %16 = vsyncadd [#allocation4], %s15
      %s18 = sshll.u32 [#allocation3], 4
      %s19 = int_to_ptr.vmem [resolvable:$true] %s18
      %21 = dma.hbm_to_vmem [thread:$0]  %s1, 256, %s19, [#allocation4]
    $region9: #{tpu_custom_call.1} parent=1 // pred_fallthru
      _
    // Predicated region
    $region10: #{tpu_custom_call.1} parent=1 // pred_check
      _
    $region11: #{tpu_custom_call.1} parent=1 // pred_check_branch
      %23 = sbr.rel (0) target = $region13
    $region12: #{tpu_custom_call.1} parent=1 // pred_region
      %24 = dma.done [#allocation4], 256
    $region13: #{tpu_custom_call.1} parent=1 // pred_fallthru
      _
    %s25 = sld [smem:[#allocation2]]
    %v26 = vld [vmem:[#allocation3] sm:$0xff]
    %v27 = vld [vmem:[#allocation3 + $0x8] sm:$0xff]
    %v28 = vstv %s25
    %v29 = vmul.f32 %v26, %v28
    %v30 = vmul.f32 %v27, %v28
    %31 = vst [vmem:[#allocation6] sm:$0xff] %v29
    %32 = vst [vmem:[#allocation6 + $0x8] sm:$0xff] %v30
    // Predicated region
    $region14: #{tpu_custom_call.1} parent=1 // pred_check
      _
    $region15: #{tpu_custom_call.1} parent=1 // pred_check_branch
      %34 = sbr.rel (0) target = $region17
    $region16: #{tpu_custom_call.1} parent=1 // pred_region
      %s36 = ssub.s32 256, 256
      %37 = vsyncadd [#allocation5], %s36
      %s39 = sshll.u32 [#allocation6], 4
      %s40 = int_to_ptr.vmem [resolvable:$true] %s39
      %42 = dma.vmem_to_hbm [thread:$0]  %s40, 256, %s2, [#allocation5]
    $region17: #{tpu_custom_call.1} parent=1 // pred_fallthru
      _
    // Predicated region
    $region18: #{tpu_custom_call.1} parent=1 // pred_check
      _
    $region19: #{tpu_custom_call.1} parent=1 // pred_check_branch
      %44 = sbr.rel (0) target = $region21
    $region20: #{tpu_custom_call.1} parent=1 // pred_region
      %45 = dma.done [#allocation5], 256
    $region21: #{tpu_custom_call.1} parent=1 // pred_fallthru
      _
    %46 = vsyncpa [#allocation4], 1
    %47 = vsyncpa [#allocation5], 1

</llo_original>
